<compile_context>
chip_gen: v5e
topology: v5e:2x2
jax: 0.10.0
libtpu: 0.0.40
codegen_flags: <defaults>
</compile_context>

<pallas_src>
import functools

import jax
import jax.numpy as jnp
import numpy as np
from jax import lax
from jax.experimental import pallas as pl
from jax.experimental.pallas import tpu as pltpu


def get_concat_index(class_num):
    """Same pair enumeration as intraAsymmetricLoss.getConcatIndex."""
    idx0, idx1 = [], []
    for i in range(class_num - 1):
        idx0 += [i] * (class_num - i - 1)
        idx1 += list(range(i + 1, class_num))
    return np.asarray(idx0, np.int32), np.asarray(idx1, np.int32)


def _round_up(x, m):
    return (x + m - 1) // m * m


def _sublane_quantum(dtype):
    # 8 for 32-bit, 16 for 16-bit, 32 for 8-bit dtypes (vreg sublane packing).
    return max(8, 32 // jnp.dtype(dtype).itemsize)


def _int_pow(base, n):
    """base**n for a static non-negative integer n (pure VPU, no exp/log)."""
    if n == 0:
        return jnp.ones_like(base)
    result = None
    p = base
    while n:
        if n & 1:
            result = p if result is None else result * p
        n >>= 1
        if n:
            p = p * p
    return result


def _tile_loss(x_raw, tb, sel, *, gamma_neg, gamma_pos, clip, eps):
    """Asymmetric pair loss for one (bB, bP) tile; returns f32 (bB, bP)."""
    x = x_raw.astype(jnp.float32)

    # Pair target computed in-kernel.  Each column of `sel` holds exactly two
    # ones (rows idx0[p] and idx1[p]); tb is the {0,1} binarized target, so the
    # bf16 matmul with f32 accumulation is exact and
    #   t = (target[:,idx0] > 0) * (target[:,idx1] > 0)  ==  (tb @ sel) == 2.
    t_sum = jnp.dot(tb, sel, preferred_element_type=jnp.float32)
    t_mask = t_sum > 1.5

    # TODO(synk): if v7x profiles VPU-bound, move the divide to the EUP via
    # pl.reciprocal(1 + exp(-x), approx=True) after checking the tolerance.
    sig = 1.0 / (1.0 + jnp.exp(-x))
    pos = sig
    neg = 1.0 - sig
    if clip is not None and clip > 0:
        neg = jnp.minimum(neg + clip, 1.0)

    # t in {0,1}: the two-term loss collapses to a single log of the selected
    # probability, and prob == p_sel, so this matches the reference exactly.
    p_sel = jnp.where(t_mask, pos, neg)
    loss = -jnp.log(jnp.maximum(p_sel, eps))

    if gamma_neg > 0 or gamma_pos > 0:
        base = 1.0 - p_sel                     # == 1 - prob
        gp_int = float(gamma_pos).is_integer() and gamma_pos >= 0
        gn_int = float(gamma_neg).is_integer() and gamma_neg >= 0
        if gp_int and gn_int:
            # Integer gammas (default 1 / 4): repeated multiplication on VPU.
            w = jnp.where(t_mask,
                          _int_pow(base, int(gamma_pos)),
                          _int_pow(base, int(gamma_neg)))
        else:
            gamma = jnp.where(t_mask, gamma_pos, gamma_neg)
            w = jnp.exp(gamma * jnp.log(jnp.maximum(base, 1e-30)))
        loss = loss * w
    return loss


def _sel_slice(sel_ref, bP, sel_resident):
    if sel_resident:
        # Grid-invariant (C, P_sel) block stays resident; slice the j-th tile.
        j0 = pl.multiple_of(pl.program_id(1) * bP, 128)
        return sel_ref[:, pl.ds(j0, bP)]
    return sel_ref[...]


def _asl_map_kernel(x_ref, tb_ref, sel_ref, o_ref, *,
                    gamma_neg, gamma_pos, clip, eps, bP, sel_resident):
    sel = _sel_slice(sel_ref, bP, sel_resident)
    loss = _tile_loss(x_ref[...], tb_ref[...], sel,
                      gamma_neg=gamma_neg, gamma_pos=gamma_pos,
                      clip=clip, eps=eps)
    o_ref[...] = loss.astype(o_ref.dtype)


def _asl_sum_kernel(x_ref, tb_ref, sel_ref, o_ref, *,
                    gamma_neg, gamma_pos, clip, eps, bP, sel_resident,
                    bB, B, P):
    i = pl.program_id(0)
    j = pl.program_id(1)

    @pl.when((i == 0) & (j == 0))
    def _init():
        o_ref[...] = jnp.zeros_like(o_ref)

    sel = _sel_slice(sel_ref, bP, sel_resident)
    loss = _tile_loss(x_ref[...], tb_ref[...], sel,
                      gamma_neg=gamma_neg, gamma_pos=gamma_pos,
                      clip=clip, eps=eps)

    # Ragged edge blocks contain garbage lanes; mask them out of the sum.
    row = lax.broadcasted_iota(jnp.int32, loss.shape, 0) + i * bB
    col = lax.broadcasted_iota(jnp.int32, loss.shape, 1) + j * bP
    loss = jnp.where((row < B) & (col < P), loss, 0.0)

    o_ref[...] = o_ref[...] + jnp.sum(loss)


def intra_asymmetric_loss(logits, target, class_num,
                          gamma_neg=4.0, gamma_pos=1.0, clip=0.05, eps=1e-8,
                          reduce=None, size_average=None,
                          block_b=256, block_p=2048, out_dtype=None,
                          sel_vmem_budget=4 * 1024 * 1024):
    """Forward pass of intraAsymmetricLoss.

    logits: (B, P) with P = classNum*(classNum-1)/2; target: (B, classNum).
    reduce=None  -> per-element (B, P) loss map (dtype = out_dtype or
                    logits.dtype; pass jnp.bfloat16 to halve writeback traffic).
    reduce=True  -> fused in-kernel sum (size_average=True -> mean), f32 scalar.
    """
    B, P = logits.shape
    C = target.shape[1]
    assert C == class_num
    assert P == class_num * (class_num - 1) // 2

    idx0, idx1 = get_concat_index(class_num)

    # Tile sizes: lane-dense pairs axis; batch axis aligned to the dtype's
    # sublane quantum.  Defaults give ~2 MiB f32 tiles (good HBM efficiency).
    sub = _sublane_quantum(logits.dtype)
    bB = min(_round_up(block_b, sub), _round_up(B, sub))
    bP = min(_round_up(block_p, 128), _round_up(P, 128))

    def _grid(bb, bp):
        return (-(-B // bb), -(-P // bp))

    # Keep >= 2 programs on a parallel axis when possible so v7x megacore can
    # shard the grid across both TensorCores.
    gi, gj = _grid(bB, bP)
    if gi * gj == 1:
        if bP >= 256:
            bP = _round_up((P + 1) // 2, 128)
        elif bB >= 2 * sub:
            bB = _round_up(-(-B // 2), sub)
        gi, gj = _grid(bB, bP)

    # Combined one-hot selection matrix (sel0 + sel1): exactly two ones per
    # valid column, zeros in padded columns.  One matmul replaces the previous
    # two selections + multiply.
    P_sel = gj * bP
    sel_np = np.zeros((C, P_sel), np.float32)
    sel_np[idx0, np.arange(P)] += 1.0
    sel_np[idx1, np.arange(P)] += 1.0
    sel = jnp.asarray(sel_np, jnp.bfloat16)

    # Binarized target (tiny): (B, C) bf16 in {0, 1}.
    tb = (target > 0).astype(jnp.bfloat16)

    # Keep the whole selection matrix resident in VMEM (DMA'd once) when small;
    # otherwise fall back to per-j tiles (re-fetched per grid step).
    sel_resident = C * P_sel * 2 <= sel_vmem_budget
    if sel_resident:
        sel_spec = pl.BlockSpec((C, P_sel), lambda i, j: (0, 0))
    else:
        sel_spec = pl.BlockSpec((C, bP), lambda i, j: (0, j))

    in_specs = [
        pl.BlockSpec((bB, bP), lambda i, j: (i, j)),   # logits tile (native dtype)
        pl.BlockSpec((bB, C), lambda i, j: (i, 0)),    # binarized target
        sel_spec,                                      # pair-selection matrix
    ]

    common = dict(gamma_neg=float(gamma_neg), gamma_pos=float(gamma_pos),
                  clip=clip, eps=float(eps), bP=bP, sel_resident=sel_resident)

    # 32 MiB scoped-VMEM limit: raises v5e's 16 MiB default, matches the
    # v6e/v7x default, stays well under v7x's 64 MiB physical VMEM.
    vmem_limit = 32 * 1024 * 1024

    if not reduce:
        # No wrapper pad / output slice: ceil-div grid; Pallas masks the ragged
        # edge blocks (math is purely elementwise, writes in padding dropped).
        out_dtype = logits.dtype if out_dtype is None else out_dtype
        return pl.pallas_call(
            functools.partial(_asl_map_kernel, **common),
            out_shape=jax.ShapeDtypeStruct((B, P), out_dtype),
            grid=(gi, gj),
            in_specs=in_specs,
            out_specs=pl.BlockSpec((bB, bP), lambda i, j: (i, j)),
            compiler_params=pltpu.CompilerParams(
                dimension_semantics=("parallel", "parallel"),
                vmem_limit_bytes=vmem_limit),
        )(logits, tb, sel)

    # Fused reduction: accumulate per-tile partial sums into the resident (1,1)
    # output block — the (B, P) loss map is never written to HBM.
    total = pl.pallas_call(
        functools.partial(_asl_sum_kernel, **common, bB=bB, B=B, P=P),
        out_shape=jax.ShapeDtypeStruct((1, 1), jnp.float32),
        grid=(gi, gj),
        in_specs=in_specs,
        out_specs=pl.BlockSpec((1, 1), lambda i, j: (0, 0)),
        compiler_params=pltpu.CompilerParams(
            dimension_semantics=("arbitrary", "arbitrary"),
            vmem_limit_bytes=vmem_limit),
    )(logits, tb, sel)[0, 0]

    if size_average:
        return total / (B * P)
    return total


def _reference(logits, target, class_num,
               gamma_neg=4.0, gamma_pos=1.0, clip=0.05, eps=1e-8):
    idx0, idx1 = get_concat_index(class_num)
    t1 = (target[:, idx0] > 0).astype(jnp.float32)
    t2 = (target[:, idx1] > 0).astype(jnp.float32)
    t = t1 * t2
    sig = jax.nn.sigmoid(logits.astype(jnp.float32))
    pos = sig
    neg = 1.0 - sig
    if clip is not None and clip > 0:
        neg = jnp.minimum(neg + clip, 1.0)
    loss = -(t * jnp.log(jnp.maximum(pos, eps)) +
             (1.0 - t) * jnp.log(jnp.maximum(neg, eps)))
    prob = pos * t + neg * (1.0 - t)
    gamma = gamma_pos * t + gamma_neg * (1.0 - t)
    return loss * jnp.power(1.0 - prob, gamma)


if __name__ == "__main__":
    key = jax.random.PRNGKey(0)
    k1, k2, k3, k4 = jax.random.split(key, 4)

    # Test 1: small canonical shape (single tile), per-element output.
    B, CLASS_NUM = 8, 16
    P = CLASS_NUM * (CLASS_NUM - 1) // 2                 # 120 pairs
    logits = jax.random.normal(k1, (B, P), dtype=jnp.float32)
    target = jax.random.bernoulli(k2, 0.4, (B, CLASS_NUM)).astype(jnp.float32)

    out = jax.block_until_ready(intra_asymmetric_loss(logits, target, CLASS_NUM))
    ref = jax.block_until_ready(_reference(logits, target, CLASS_NUM))
    np.testing.assert_allclose(np.asarray(out), np.asarray(ref),
                               rtol=1e-5, atol=1e-5)

    # Test 2: exercise both grid axes + ragged pairs edge (grid (3, 2)).
    B2, CLASS_NUM2 = 24, 20
    P2 = CLASS_NUM2 * (CLASS_NUM2 - 1) // 2              # 190 pairs
    logits2 = jax.random.normal(k3, (B2, P2), dtype=jnp.float32)
    target2 = jax.random.bernoulli(k4, 0.3, (B2, CLASS_NUM2)).astype(jnp.float32)

    out2 = jax.block_until_ready(
        intra_asymmetric_loss(logits2, target2, CLASS_NUM2,
                              block_b=8, block_p=128))
    ref2 = jax.block_until_ready(_reference(logits2, target2, CLASS_NUM2))
    np.testing.assert_allclose(np.asarray(out2), np.asarray(ref2),
                               rtol=1e-5, atol=1e-5)

    # Test 3: non-resident selection-matrix fallback path.
    out3 = jax.block_until_ready(
        intra_asymmetric_loss(logits2, target2, CLASS_NUM2,
                              block_b=8, block_p=128, sel_vmem_budget=0))
    np.testing.assert_allclose(np.asarray(out3), np.asarray(ref2),
                               rtol=1e-5, atol=1e-5)

    # Test 4: fused mean reduction (masked ragged edges).
    mean_out = jax.block_until_ready(
        intra_asymmetric_loss(logits2, target2, CLASS_NUM2,
                              reduce=True, size_average=True,
                              block_b=8, block_p=128))
    np.testing.assert_allclose(float(mean_out), float(jnp.mean(ref2)),
                               rtol=1e-4, atol=1e-6)

    print("KERNEL_OK")
</pallas_src>

<mosaic_0001>
module attributes {stable_mosaic.version = 11 : i64} {
  func.func @_asl_map_kernel(%arg0: i32, %arg1: i32, %arg2: memref<8x128xf32, #tpu.memory_space<vmem>>, %arg3: memref<8x16xbf16, #tpu.memory_space<vmem>>, %arg4: memref<16x128xbf16, #tpu.memory_space<vmem>>, %arg5: memref<8x128xf32, #tpu.memory_space<vmem>>) attributes {dimension_semantics = [#tpu.dimension_semantics<parallel>, #tpu.dimension_semantics<parallel>], iteration_bounds = array<i64: 1, 1>, scalar_prefetch = 0 : i64, scratch_operands = 0 : i64, tpu.core_type = #tpu.core_type<tc>, window_params = [{transform_indices = @transform_0, window_bounds = array<i64: 8, 128>}, {transform_indices = @transform_1, window_bounds = array<i64: 8, 16>}, {pipeline_mode = #tpu.pipeline_mode<synchronous>, transform_indices = @transform_2, window_bounds = array<i64: 16, 128>}, {transform_indices = @transform_3, window_bounds = array<i64: 8, 128>}]} {
    %c128_i32 = arith.constant 128 : i32
    %0 = arith.muli %arg1, %c128_i32 : i32
    %1 = tpu.assume_multiple %0, 128 : i32
    %c0 = arith.constant 0 : index
    %2 = arith.index_cast %1 : i32 to index
    %3 = vector.load %arg4[%c0, %2] : memref<16x128xbf16, #tpu.memory_space<vmem>>, vector<16x128xbf16>
    %c0_0 = arith.constant 0 : index
    %c0_1 = arith.constant 0 : index
    %4 = vector.load %arg2[%c0_0, %c0_1] : memref<8x128xf32, #tpu.memory_space<vmem>>, vector<8x128xf32>
    %c0_2 = arith.constant 0 : index
    %c0_3 = arith.constant 0 : index
    %5 = vector.load %arg3[%c0_2, %c0_3] : memref<8x16xbf16, #tpu.memory_space<vmem>>, vector<8x16xbf16>
    %cst = arith.constant dense<0.000000e+00> : vector<8x128xf32>
    %6 = tpu.matmul %5, %3, %cst {dimension_numbers = #tpu.dot_dimension_numbers<[1], [0], [0], [1], [0, 0, 1, 1], [], []>} : vector<8x16xbf16>, vector<16x128xbf16>, vector<8x128xf32> -> vector<8x128xf32>
    %cst_4 = arith.constant 1.500000e+00 : f32
    %7 = vector.broadcast %cst_4 : f32 to vector<8x128xf32>
    %8 = arith.cmpf ogt, %6, %7 : vector<8x128xf32>
    %cst_5 = arith.constant 0.000000e+00 : f32
    %9 = vector.broadcast %cst_5 : f32 to vector<8x128xf32>
    %10 = arith.subf %9, %4 : vector<8x128xf32>
    %11 = math.exp %10 : vector<8x128xf32>
    %cst_6 = arith.constant 1.000000e+00 : f32
    %12 = vector.broadcast %cst_6 : f32 to vector<8x128xf32>
    %13 = arith.addf %12, %11 : vector<8x128xf32>
    %cst_7 = arith.constant 1.000000e+00 : f32
    %14 = vector.broadcast %cst_7 : f32 to vector<8x128xf32>
    %15 = arith.divf %14, %13 : vector<8x128xf32>
    %cst_8 = arith.constant 1.000000e+00 : f32
    %16 = vector.broadcast %cst_8 : f32 to vector<8x128xf32>
    %17 = arith.subf %16, %15 : vector<8x128xf32>
    %cst_9 = arith.constant 5.000000e-02 : f32
    %18 = vector.broadcast %cst_9 : f32 to vector<8x128xf32>
    %19 = arith.addf %17, %18 : vector<8x128xf32>
    %cst_10 = arith.constant 1.000000e+00 : f32
    %20 = vector.broadcast %cst_10 : f32 to vector<8x128xf32>
    %21 = arith.minimumf %19, %20 : vector<8x128xf32>
    %22 = arith.select %8, %15, %21 : vector<8x128xi1>, vector<8x128xf32>
    %cst_11 = arith.constant 9.99999993E-9 : f32
    %23 = vector.broadcast %cst_11 : f32 to vector<8x128xf32>
    %24 = arith.maximumf %22, %23 : vector<8x128xf32>
    %25 = math.log %24 : vector<8x128xf32>
    %cst_12 = arith.constant 0.000000e+00 : f32
    %26 = vector.broadcast %cst_12 : f32 to vector<8x128xf32>
    %27 = arith.subf %26, %25 : vector<8x128xf32>
    %cst_13 = arith.constant 1.000000e+00 : f32
    %28 = vector.broadcast %cst_13 : f32 to vector<8x128xf32>
    %29 = arith.subf %28, %22 : vector<8x128xf32>
    %30 = arith.mulf %29, %29 : vector<8x128xf32>
    %31 = arith.mulf %30, %30 : vector<8x128xf32>
    %32 = arith.select %8, %29, %31 : vector<8x128xi1>, vector<8x128xf32>
    %33 = arith.mulf %27, %32 : vector<8x128xf32>
    %c0_14 = arith.constant 0 : index
    %c0_15 = arith.constant 0 : index
    %34 = vector.load %arg5[%c0_14, %c0_15] : memref<8x128xf32, #tpu.memory_space<vmem>>, vector<8x128xf32>
    tpu.vector_store %arg5[%c0_14, %c0_15], %33 {strides = array<i32>} : memref<8x128xf32, #tpu.memory_space<vmem>>, vector<8x128xf32>,
    return
  }
  func.func @transform_0(%arg0: i32, %arg1: i32) -> (i32, i32) {
    %c0_i32 = arith.constant 0 : i32
    return %arg0, %arg1 : i32, i32
  }
  func.func @transform_1(%arg0: i32, %arg1: i32) -> (i32, i32) {
    %c0_i32 = arith.constant 0 : i32
    %c0_i32_0 = arith.constant 0 : i32
    return %arg0, %c0_i32 : i32, i32
  }
  func.func @transform_2(%arg0: i32, %arg1: i32) -> (i32, i32) {
    %c0_i32 = arith.constant 0 : i32
    %c0_i32_0 = arith.constant 0 : i32
    %c0_i32_1 = arith.constant 0 : i32
    return %c0_i32, %c0_i32_0 : i32, i32
  }
  func.func @transform_3(%arg0: i32, %arg1: i32) -> (i32, i32) {
    %c0_i32 = arith.constant 0 : i32
    return %arg0, %arg1 : i32, i32
  }
}

</mosaic_0001>

<llo_original>
// kernel: tpu_custom_call.1
$region0: #{tpu_custom_call.1}
  #allocation0 [shape = 'u32[]', space=smem, size = 0x4, offset = 0x4, fixed_abs, tag = 'smem constant byte address 0x4 - core index']
  #allocation1 [shape = 'u32[72,128]{1,0:T(1,128)}', space=vmem, size = 0x9000, scoped, tag = 'internal scratch']
  %s0 = inlined_call_operand.hbm [shape: f32[8,120], index: 0, kind: input, shape index: {}]
  %s1 = inlined_call_operand.hbm [shape: bf16[8,16], index: 1, kind: input, shape index: {}]
  %s2 = inlined_call_operand.hbm [shape: bf16[16,128], index: 2, kind: input, shape index: {}]
  %s3 = inlined_call_operand.hbm [shape: f32[8,120], index: 3, kind: output, shape index: {}]
  %s4 = sld [smem:[#allocation0]]
  $region34: #{tpu_custom_call.1} parent=0
    _
  %s6 = ssub.s32 1, %s4
  %s7 = scalar_select 0, %s6, %s4
  $region1: #{tpu_custom_call.1} parent=0
    #allocation2 [shape = 'u8[4096]{0}', space=vmem, size = 0x1000, scoped, tag = 'input window, operand 0, single buffered']
    #allocation3 [shape = 's32[1]{0}', space=sflag, size = 0x4, scoped, tag = 'scoped memory for tpu_custom_call.1']
    #allocation4 [shape = 's32[1]{0}', space=sflag, size = 0x4, scoped, tag = 'scoped memory for tpu_custom_call.1']
    #allocation5 [shape = 'u8[2048]{0}', space=vmem, size = 0x800, scoped, tag = 'input window, operand 1, single buffered']
    #allocation6 [shape = 's32[1]{0}', space=sflag, size = 0x4, scoped, tag = 'scoped memory for tpu_custom_call.1']
    #allocation7 [shape = 'u8[4096]{0}', space=vmem, size = 0x1000, scoped, tag = 'input window, operand 2, single buffered']
    #allocation8 [shape = 'u8[4096]{0}', space=vmem, size = 0x1000, scoped, tag = 'output window, operand 0, single buffered']
    %8 = vsyncpa [#allocation3], 0
    %9 = vsyncpa [#allocation6], 0
    %10 = vsyncpa [#allocation4], 0
    // Predicated region
    $region2: #{tpu_custom_call.1} parent=1 // pred_check
      _
    $region3: #{tpu_custom_call.1} parent=1 // pred_check_branch
      %12 = sbr.rel (0) target = $region5
    $region4: #{tpu_custom_call.1} parent=1 // pred_region
      %14 = vsyncadd [#allocation3], 0
      %s16 = sshll.u32 %s0, 4
      %s17 = int_to_ptr.hbm [resolvable:$true] %s16
      %s18 = sshll.u32 [#allocation2], 4
      %s19 = int_to_ptr.vmem [resolvable:$true] %s18
      %21 = dma.hbm_to_vmem [thread:$0]  %s17, 128, %s19, [#allocation3]
    $region5: #{tpu_custom_call.1} parent=1 // pred_fallthru
      _
    // Predicated region
    $region6: #{tpu_custom_call.1} parent=1 // pred_check
      _
    $region7: #{tpu_custom_call.1} parent=1 // pred_check_branch
      %23 = sbr.rel (0) target = $region9
    $region8: #{tpu_custom_call.1} parent=1 // pred_region
      %25 = vsyncadd [#allocation6], 0
      %s27 = sshll.u32 %s1, 4
      %s28 = int_to_ptr.hbm [resolvable:$true] %s27
      %s29 = sshll.u32 [#allocation5], 4
      %s30 = int_to_ptr.vmem [resolvable:$true] %s29
      %32 = dma.hbm_to_vmem [thread:$0]  %s28, 64, %s30, [#allocation6]
    $region9: #{tpu_custom_call.1} parent=1 // pred_fallthru
      _
    // Predicated region
    $region10: #{tpu_custom_call.1} parent=1 // pred_check
      _
    $region11: #{tpu_custom_call.1} parent=1 // pred_check_branch
      %34 = sbr.rel (0) target = $region13
    $region12: #{tpu_custom_call.1} parent=1 // pred_region
      %36 = vsyncadd [#allocation6], 0
      %s37 = sshll.u32 %s2, 4
      %s38 = int_to_ptr.hbm [resolvable:$true] %s37
      %s39 = sshll.u32 [#allocation7], 4
      %s40 = int_to_ptr.vmem [resolvable:$true] %s39
      %45 = dma.hbm_to_vmem [thread:$0]  %s38, 128, %s40, [#allocation6], 64, 64, 4
    $region13: #{tpu_custom_call.1} parent=1 // pred_fallthru
      _
    // Predicated region
    $region14: #{tpu_custom_call.1} parent=1 // pred_check
      _
    $region15: #{tpu_custom_call.1} parent=1 // pred_check_branch
      %47 = sbr.rel (0) target = $region17
    $region16: #{tpu_custom_call.1} parent=1 // pred_region
      %49 = dma.done [#allocation3], 128
    $region17: #{tpu_custom_call.1} parent=1 // pred_fallthru
      _
    // Predicated region
    $region18: #{tpu_custom_call.1} parent=1 // pred_check
      _
    $region19: #{tpu_custom_call.1} parent=1 // pred_check_branch
      %51 = sbr.rel (0) target = $region21
    $region20: #{tpu_custom_call.1} parent=1 // pred_region
      %53 = dma.done [#allocation6], 64
    $region21: #{tpu_custom_call.1} parent=1 // pred_fallthru
      _
    // Predicated region
    $region22: #{tpu_custom_call.1} parent=1 // pred_check
      _
    $region23: #{tpu_custom_call.1} parent=1 // pred_check_branch
      %55 = sbr.rel (0) target = $region25
    $region24: #{tpu_custom_call.1} parent=1 // pred_region
      %57 = dma.done [#allocation6], 128
    $region25: #{tpu_custom_call.1} parent=1 // pred_fallthru
      _
    %s59 = smul.u32 0, 128
    %s60 = sshra.s32 %s59, 7
    %s61 = sand.u32 %s59, 127
    %s62 = smul.addr %s60, 4
    %s63 = scalar_lea.vmem [#allocation7], %s62
    %v64 = vld [vmem:[%s63] sm:$0xf]
    %v65 = vld [vmem:[%s63 + $0x4] sm:$0xf]
    %v66 = vld [vmem:[#allocation2] sm:$0xff]
    %v67 = vld [vmem:[#allocation5] sm:$0xf]
    %v70 = vunpack.c.l.b16 %v64
    %v71 = vunpack.c.l.b16 %v65
    %v72 = vpack.c.b16 %v71, %v70
    %vm74 = vcmask 130048
    %v76 = vsel %vm74, %v67, 0
    %78 = vmatpush.bf16.msra.mxu0 0
    %79 = vmatpush.bf16.msra.mxu0 0
    %80 = vmatpush.bf16.msra.mxu0 0
    %81 = vmatpush.bf16.msra.mxu0 0
    %82 = vmatpush.bf16.msra.mxu0 0
    %83 = vmatpush.bf16.msra.mxu0 0
    %84 = vmatpush.bf16.msra.mxu0 0
    %85 = vmatpush.bf16.msra.mxu0 %v72
    %86 = vmatmul.bf16.gmra.mxu0 %v76
    %v87 = vpop.f32.mrf.mxu0
    %v88 = vadd.f32 0.0, %v87
    %v89 = vpop.f32.mrf.mxu0
    %90 = vdwg.mxu0
    %vm91 = vcmp.gt.f32.partialorder %v88, 1.5
    %v92 = vsub.f32 0.0, %v66
    %v93 = vmul.f32 %v92, 1.442695
    %v94 = vpow.pop %v93
    %v95 = vadd.f32 %v94, 1.0
    %v96 = vrcp.pop %v95
    %v97 = vmul.f32 %v95, %v96
    %v98 = vsub.f32 1.0, %v97
    %v99 = vmul.f32 %v96, %v98
    %v100 = vadd.f32 %v96, %v99
    %vm101 = vweird.f32 %v95
    %vm102 = vweird.f32 %v96
    %vm103 = vmor %vm101, %vm102
    %v104 = vsel %vm103, %v96, %v100
    %v105 = vand.u32 2147483647, %v95
    %vm106 = vcmp.eq.f32.partialorder %v105, 8.507059e+37
    %v107 = vand.u32 %v95, 2147483648
    %v108 = vor.u32 1.1754944e-38, %v107
    %v109 = vsel %vm106, %v108, %v104
    %v110 = vmul.f32 1.0, %v109
    %v111 = vsub.f32 1.0, %v110
    %v112 = vadd.f32 %v111, 0.05
    %v113 = vmin.f32 %v112, 1.0
    %v114 = vsel %vm91, %v110, %v113
    %v115 = vmax.f32 %v114, 1e-08
    %v116 = vlog2.pop %v115
    %v117 = vmul.f32 %v116, 0.6931472
    %v118 = vsub.f32 0.0, %v117
    %v119 = vsub.f32 1.0, %v114
    %v120 = vmul.f32 %v119, %v119
    %v121 = vmul.f32 %v120, %v120
    %v122 = vsel %vm91, %v119, %v121
    %v123 = vmul.f32 %v118, %v122
    %124 = vst [vmem:[#allocation8] sm:$0xff] %v123
    // Predicated region
    $region26: #{tpu_custom_call.1} parent=1 // pred_check
      _
    $region27: #{tpu_custom_call.1} parent=1 // pred_check_branch
      %126 = sbr.rel (0) target = $region29
    $region28: #{tpu_custom_call.1} parent=1 // pred_region
      %128 = vsyncadd [#allocation4], 0
      %s130 = sshll.u32 [#allocation8], 4
      %s131 = int_to_ptr.vmem [resolvable:$true] %s130
      %s132 = sshll.u32 %s3, 4
      %s133 = int_to_ptr.hbm [resolvable:$true] %s132
      %135 = dma.vmem_to_hbm [thread:$0]  %s131, 128, %s133, [#allocation4]
    $region29: #{tpu_custom_call.1} parent=1 // pred_fallthru
      _
    // Predicated region
    $region30: #{tpu_custom_call.1} parent=1 // pred_check
      _
    $region31: #{tpu_custom_call.1} parent=1 // pred_check_branch
      %137 = sbr.rel (0) target = $region33
    $region32: #{tpu_custom_call.1} parent=1 // pred_region
      %139 = dma.done [#allocation4], 128
    $region33: #{tpu_custom_call.1} parent=1 // pred_fallthru
      _
    %140 = vsyncpa [#allocation3], 1
    %141 = vsyncpa [#allocation6], 1
    %142 = vsyncpa [#allocation4], 1

</llo_original>
